<compile_context>
chip_gen: v6e
topology: v6e:2x2x1
jax: 0.10.0
libtpu: 0.0.40
codegen_flags: <defaults>
</compile_context>

<pallas_src>
import functools

import jax
import jax.numpy as jnp
from jax.experimental import pallas as pl
from jax.experimental.pallas import tpu as pltpu

GRID_MIN = -2.0
GRID_MAX = 2.0
NUM_GRIDS = 8
LN_EPS = 1e-5  # PyTorch nn.LayerNorm default


def _round_up(x, m):
    return (x + m - 1) // m * m


def radial_linear_kernel(x_ref, ln_w_ref, ln_b_ref, w_ref, bb_ref, o_ref,
                         op_ref, *, grid_scaled, inv_denom):
    """One (tm, to) output tile of RadialLinear.

    x_ref    : (tm, C)          input rows (f32)
    ln_w_ref : (1, C)           LayerNorm gamma
    ln_b_ref : (1, C)           LayerNorm beta
    w_ref    : ((G+1)*C, to)    fused [spline | base] weight, bf16
    bb_ref   : (1, to)          base linear bias (f32)
    o_ref    : (tm, to)         output tile
    op_ref   : (tm, (G+1)*C)    VMEM scratch: cached wide-K operand (bf16)
    """
    j = pl.program_id(1)

    # Build the wide-K operand once per row tile (j == 0) and cache it in
    # VMEM; subsequent output tiles of the same row tile only do the matmul.
    @pl.when(j == 0)
    def _():
        x = x_ref[...].astype(jnp.float32)

        # ---- LayerNorm over features (biased variance, like PyTorch) ------
        mean = jnp.mean(x, axis=-1, keepdims=True)
        var = jnp.mean((x - mean) ** 2, axis=-1, keepdims=True)
        xn = (x - mean) * jax.lax.rsqrt(var + LN_EPS)
        xn = xn * ln_w_ref[...] + ln_b_ref[...]

        # ---- RBF expansion (1/denom hoisted out of the loop) --------------
        # basis_g = exp(-((xn - grid_g)/denom)^2) = exp(-(u - grid_g/denom)^2)
        u = xn * inv_denom
        parts = []
        for gs in grid_scaled:                  # static unrolled, G = 8
            d = u - gs
            parts.append(jnp.exp(-(d * d)))     # EUP

        # ---- Base path: SiLU on the RAW (un-normalized) x -----------------
        parts.append(x * jax.nn.sigmoid(x))

        op_ref[...] = jnp.concatenate(parts, axis=-1).astype(op_ref.dtype)

    # ---- Single wide-K bf16 matmul covering spline + base paths -----------
    acc = jnp.dot(op_ref[...], w_ref[...], preferred_element_type=jnp.float32)
    o_ref[...] = (acc + bb_ref[...]).astype(o_ref.dtype)


def _prepare_weights(sw_torch, bw_torch, base_b, C, O, O_pad):
    """Fuse torch-layout weights into a single ((G+1)*C, O_pad) bf16 matrix.

    torch flattens spline_basis as index c*G + g; the kernel lays the operand
    out as [g=0 block | ... | g=G-1 block | SiLU(x)], i.e. index g*C + c, with
    the base weight appended as the last C rows.
    """
    sw = jnp.transpose(sw_torch.reshape(O, C, NUM_GRIDS), (2, 1, 0))   # (G,C,O)
    sw = sw.reshape(NUM_GRIDS * C, O)
    w = jnp.concatenate([sw, bw_torch.T], axis=0)                      # ((G+1)C,O)
    w = jnp.pad(w, ((0, 0), (0, O_pad - O))).astype(jnp.bfloat16)
    bb = jnp.pad(base_b.reshape(1, O),
                 ((0, 0), (0, O_pad - O))).astype(jnp.float32)
    return w, bb


def radial_linear(x, ln_w, ln_b, sw_torch, bw_torch, base_b, *,
                  tm_max=512, to_max=512):
    """x: (..., C) -> (..., O). All heavy compute runs in the Pallas kernel."""
    *lead, C = x.shape
    O = sw_torch.shape[0]
    x2d = x.reshape(-1, C)
    M = x2d.shape[0]

    # Row tiling: big tiles amortize per-step overhead & fill the MXU; pad M.
    tm = min(tm_max, _round_up(M, 8))
    M_pad = _round_up(M, tm)
    if M_pad != M:
        x2d = jnp.pad(x2d, ((0, M_pad - M), (0, 0)))

    # Output tiling: lane-dense (multiple of 128) slabs, tiled over O so the
    # resident fused-weight block stays small.
    O_pad = _round_up(O, 128)
    if O_pad > to_max:
        to = to_max
        O_pad = _round_up(O_pad, to)
    else:
        to = O_pad

    w_fused, bb_pad = _prepare_weights(sw_torch, bw_torch, base_b, C, O, O_pad)

    grid_vals = tuple(GRID_MIN + (GRID_MAX - GRID_MIN) * i / (NUM_GRIDS - 1)
                      for i in range(NUM_GRIDS))
    denom = (GRID_MAX - GRID_MIN) / (NUM_GRIDS - 1)
    inv_denom = 1.0 / denom
    grid_scaled = tuple(g * inv_denom for g in grid_vals)

    kernel = functools.partial(
        radial_linear_kernel, grid_scaled=grid_scaled, inv_denom=inv_denom)
    K = (NUM_GRIDS + 1) * C

    out = pl.pallas_call(
        kernel,
        out_shape=jax.ShapeDtypeStruct((M_pad, O_pad), x.dtype),
        grid_spec=pltpu.PrefetchScalarGridSpec(
            num_scalar_prefetch=0,
            grid=(M_pad // tm, O_pad // to),
            in_specs=[
                pl.BlockSpec((tm, C), lambda i, j: (i, 0)),
                pl.BlockSpec((1, C), lambda i, j: (0, 0)),
                pl.BlockSpec((1, C), lambda i, j: (0, 0)),
                pl.BlockSpec((K, to), lambda i, j: (0, j)),
                pl.BlockSpec((1, to), lambda i, j: (0, j)),
            ],
            out_specs=pl.BlockSpec((tm, to), lambda i, j: (i, j)),
            scratch_shapes=[pltpu.VMEM((tm, K), jnp.bfloat16)],
        ),
        compiler_params=pltpu.CompilerParams(
            # j carries the cached operand scratch -> "arbitrary";
            # i (row tiles) is fully independent -> "parallel" (megacore).
            dimension_semantics=("parallel", "arbitrary"),
        ),
    )(x2d, ln_w, ln_b, w_fused, bb_pad)

    return out[:M, :O].reshape(*lead, O)


def radial_linear_ref(x, ln_w, ln_b, sw_torch, bw_torch, base_b):
    """Plain-JAX f32 reference mirroring the PyTorch forward exactly."""
    mean = jnp.mean(x, axis=-1, keepdims=True)
    var = jnp.mean((x - mean) ** 2, axis=-1, keepdims=True)
    xn = (x - mean) / jnp.sqrt(var + LN_EPS) * ln_w[0] + ln_b[0]
    grid = jnp.linspace(GRID_MIN, GRID_MAX, NUM_GRIDS)
    denom = (GRID_MAX - GRID_MIN) / (NUM_GRIDS - 1)
    basis = jnp.exp(-(((xn[..., None] - grid) / denom) ** 2))      # (..., C, G)
    basis = basis.reshape(*basis.shape[:-2], -1)                   # (..., C*G)
    y = basis @ sw_torch.T
    y = y + (x * jax.nn.sigmoid(x)) @ bw_torch.T + base_b[0]
    return y


if __name__ == "__main__":
    B, S, C, O = 2, 8, 32, 32          # in_features=32, out_features=32

    key = jax.random.PRNGKey(0)
    k_x, k_sw, k_bw, k_bb = jax.random.split(key, 4)

    x = jax.random.normal(k_x, (B, S, C), jnp.float32)

    # LayerNorm params (elementwise affine, default init)
    ln_w = jnp.ones((1, C), jnp.float32)
    ln_b = jnp.zeros((1, C), jnp.float32)

    # _Spline weight: torch layout (O, C*G), trunc_normal(std=0.1)
    sw_torch = 0.1 * jax.random.truncated_normal(
        k_sw, -2.0, 2.0, (O, C * NUM_GRIDS), dtype=jnp.float32)

    # base nn.Linear: uniform init (kaiming-uniform-like bound)
    bound = 1.0 / (C ** 0.5)
    bw_torch = jax.random.uniform(k_bw, (O, C), jnp.float32, -bound, bound)
    base_b = jax.random.uniform(k_bb, (1, O), jnp.float32, -bound, bound)

    y = radial_linear(x, ln_w, ln_b, sw_torch, bw_torch, base_b)
    jax.block_until_ready(y)

    y_ref = radial_linear_ref(x, ln_w, ln_b, sw_torch, bw_torch, base_b)
    assert y.shape == (B, S, O)
    # bf16 MXU operands -> slightly looser tolerance vs the pure-f32 reference.
    err = float(jnp.max(jnp.abs(y - y_ref)))
    assert jnp.allclose(y, y_ref, atol=5e-2, rtol=5e-2), err

    print("KERNEL_OK")
</pallas_src>

<mosaic_0001>
module attributes {stable_mosaic.version = 11 : i64} {
  func.func @radial_linear_kernel(%arg0: i32, %arg1: i32, %arg2: memref<16x32xf32, #tpu.memory_space<vmem>>, %arg3: memref<1x32xf32, #tpu.memory_space<vmem>>, %arg4: memref<1x32xf32, #tpu.memory_space<vmem>>, %arg5: memref<288x128xbf16, #tpu.memory_space<vmem>>, %arg6: memref<1x128xf32, #tpu.memory_space<vmem>>, %arg7: memref<16x128xf32, #tpu.memory_space<vmem>>, %arg8: memref<16x288xbf16, #tpu.memory_space<vmem>>) attributes {dimension_semantics = [#tpu.dimension_semantics<parallel>, #tpu.dimension_semantics<arbitrary>], iteration_bounds = array<i64: 1, 1>, scalar_prefetch = 0 : i64, scratch_operands = 1 : i64, tpu.core_type = #tpu.core_type<tc>, window_params = [{transform_indices = @transform_0, window_bounds = array<i64: 16, 32>}, {pipeline_mode = #tpu.pipeline_mode<synchronous>, transform_indices = @transform_1, window_bounds = array<i64: 1, 32>}, {pipeline_mode = #tpu.pipeline_mode<synchronous>, transform_indices = @transform_2, window_bounds = array<i64: 1, 32>}, {transform_indices = @transform_3, window_bounds = array<i64: 288, 128>}, {transform_indices = @transform_4, window_bounds = array<i64: 1, 128>}, {transform_indices = @transform_5, window_bounds = array<i64: 16, 128>}]} {
    %c0_i32 = arith.constant 0 : i32
    %0 = arith.cmpi eq, %arg1, %c0_i32 : i32
    %1 = arith.extui %0 : i1 to i32
    %c0_i32_0 = arith.constant 0 : i32
    %2 = arith.cmpi ne, %1, %c0_i32_0 : i32
    scf.if %2 {
      %c0_8 = arith.constant 0 : index
      %c0_9 = arith.constant 0 : index
      %10 = vector.load %arg2[%c0_8, %c0_9] : memref<16x32xf32, #tpu.memory_space<vmem>>, vector<16x32xf32>
      %cst_10 = arith.constant dense<0.000000e+00> : vector<16xf32>
      %11 = vector.multi_reduction <add>, %10, %cst_10 [1] : vector<16x32xf32> to vector<16xf32>
      %12 = vector.shape_cast %11 : vector<16xf32> to vector<16x1xf32>
      %cst_11 = arith.constant 3.200000e+01 : f32
      %13 = vector.broadcast %cst_11 : f32 to vector<16x1xf32>
      %14 = arith.divf %12, %13 : vector<16x1xf32>
      %15 = vector.broadcast %14 : vector<16x1xf32> to vector<16x32xf32>
      %16 = arith.subf %10, %15 : vector<16x32xf32>
      %17 = arith.mulf %16, %16 : vector<16x32xf32>
      %cst_12 = arith.constant dense<0.000000e+00> : vector<16xf32>
      %18 = vector.multi_reduction <add>, %17, %cst_12 [1] : vector<16x32xf32> to vector<16xf32>
      %19 = vector.shape_cast %18 : vector<16xf32> to vector<16x1xf32>
      %cst_13 = arith.constant 3.200000e+01 : f32
      %20 = vector.broadcast %cst_13 : f32 to vector<16x1xf32>
      %21 = arith.divf %19, %20 : vector<16x1xf32>
      %22 = vector.broadcast %14 : vector<16x1xf32> to vector<16x32xf32>
      %23 = arith.subf %10, %22 : vector<16x32xf32>
      %cst_14 = arith.constant 9.99999974E-6 : f32
      %24 = vector.broadcast %cst_14 : f32 to vector<16x1xf32>
      %25 = arith.addf %21, %24 : vector<16x1xf32>
      %26 = math.rsqrt %25 : vector<16x1xf32>
      %27 = vector.broadcast %26 : vector<16x1xf32> to vector<16x32xf32>
      %28 = arith.mulf %23, %27 : vector<16x32xf32>
      %c0_15 = arith.constant 0 : index
      %c0_16 = arith.constant 0 : index
      %29 = vector.load %arg3[%c0_15, %c0_16] : memref<1x32xf32, #tpu.memory_space<vmem>>, vector<1x32xf32>
      %30 = vector.broadcast %29 : vector<1x32xf32> to vector<16x32xf32>
      %31 = arith.mulf %28, %30 : vector<16x32xf32>
      %c0_17 = arith.constant 0 : index
      %c0_18 = arith.constant 0 : index
      %32 = vector.load %arg4[%c0_17, %c0_18] : memref<1x32xf32, #tpu.memory_space<vmem>>, vector<1x32xf32>
      %33 = vector.broadcast %32 : vector<1x32xf32> to vector<16x32xf32>
      %34 = arith.addf %31, %33 : vector<16x32xf32>
      %cst_19 = arith.constant 1.750000e+00 : f32
      %35 = vector.broadcast %cst_19 : f32 to vector<16x32xf32>
      %36 = arith.mulf %34, %35 : vector<16x32xf32>
      %cst_20 = arith.constant -3.500000e+00 : f32
      %37 = vector.broadcast %cst_20 : f32 to vector<16x32xf32>
      %38 = arith.subf %36, %37 : vector<16x32xf32>
      %39 = arith.mulf %38, %38 : vector<16x32xf32>
      %cst_21 = arith.constant 0.000000e+00 : f32
      %40 = vector.broadcast %cst_21 : f32 to vector<16x32xf32>
      %41 = arith.subf %40, %39 : vector<16x32xf32>
      %42 = math.exp %41 : vector<16x32xf32>
      %cst_22 = arith.constant -2.500000e+00 : f32
      %43 = vector.broadcast %cst_22 : f32 to vector<16x32xf32>
      %44 = arith.subf %36, %43 : vector<16x32xf32>
      %45 = arith.mulf %44, %44 : vector<16x32xf32>
      %cst_23 = arith.constant 0.000000e+00 : f32
      %46 = vector.broadcast %cst_23 : f32 to vector<16x32xf32>
      %47 = arith.subf %46, %45 : vector<16x32xf32>
      %48 = math.exp %47 : vector<16x32xf32>
      %cst_24 = arith.constant -1.500000e+00 : f32
      %49 = vector.broadcast %cst_24 : f32 to vector<16x32xf32>
      %50 = arith.subf %36, %49 : vector<16x32xf32>
      %51 = arith.mulf %50, %50 : vector<16x32xf32>
      %cst_25 = arith.constant 0.000000e+00 : f32
      %52 = vector.broadcast %cst_25 : f32 to vector<16x32xf32>
      %53 = arith.subf %52, %51 : vector<16x32xf32>
      %54 = math.exp %53 : vector<16x32xf32>
      %cst_26 = arith.constant -5.000000e-01 : f32
      %55 = vector.broadcast %cst_26 : f32 to vector<16x32xf32>
      %56 = arith.subf %36, %55 : vector<16x32xf32>
      %57 = arith.mulf %56, %56 : vector<16x32xf32>
      %cst_27 = arith.constant 0.000000e+00 : f32
      %58 = vector.broadcast %cst_27 : f32 to vector<16x32xf32>
      %59 = arith.subf %58, %57 : vector<16x32xf32>
      %60 = math.exp %59 : vector<16x32xf32>
      %cst_28 = arith.constant 5.000000e-01 : f32
      %61 = vector.broadcast %cst_28 : f32 to vector<16x32xf32>
      %62 = arith.subf %36, %61 : vector<16x32xf32>
      %63 = arith.mulf %62, %62 : vector<16x32xf32>
      %cst_29 = arith.constant 0.000000e+00 : f32
      %64 = vector.broadcast %cst_29 : f32 to vector<16x32xf32>
      %65 = arith.subf %64, %63 : vector<16x32xf32>
      %66 = math.exp %65 : vector<16x32xf32>
      %cst_30 = arith.constant 1.500000e+00 : f32
      %67 = vector.broadcast %cst_30 : f32 to vector<16x32xf32>
      %68 = arith.subf %36, %67 : vector<16x32xf32>
      %69 = arith.mulf %68, %68 : vector<16x32xf32>
      %cst_31 = arith.constant 0.000000e+00 : f32
      %70 = vector.broadcast %cst_31 : f32 to vector<16x32xf32>
      %71 = arith.subf %70, %69 : vector<16x32xf32>
      %72 = math.exp %71 : vector<16x32xf32>
      %cst_32 = arith.constant 2.500000e+00 : f32
      %73 = vector.broadcast %cst_32 : f32 to vector<16x32xf32>
      %74 = arith.subf %36, %73 : vector<16x32xf32>
      %75 = arith.mulf %74, %74 : vector<16x32xf32>
      %cst_33 = arith.constant 0.000000e+00 : f32
      %76 = vector.broadcast %cst_33 : f32 to vector<16x32xf32>
      %77 = arith.subf %76, %75 : vector<16x32xf32>
      %78 = math.exp %77 : vector<16x32xf32>
      %cst_34 = arith.constant 3.500000e+00 : f32
      %79 = vector.broadcast %cst_34 : f32 to vector<16x32xf32>
      %80 = arith.subf %36, %79 : vector<16x32xf32>
      %81 = arith.mulf %80, %80 : vector<16x32xf32>
      %cst_35 = arith.constant 0.000000e+00 : f32
      %82 = vector.broadcast %cst_35 : f32 to vector<16x32xf32>
      %83 = arith.subf %82, %81 : vector<16x32xf32>
      %84 = math.exp %83 : vector<16x32xf32>
      %85 = arith.negf %10 : vector<16x32xf32>
      %86 = math.exp %85 : vector<16x32xf32>
      %cst_36 = arith.constant 1.000000e+00 : f32
      %87 = vector.broadcast %cst_36 : f32 to vector<16x32xf32>
      %88 = arith.addf %87, %86 : vector<16x32xf32>
      %89 = arith.divf %87, %88 : vector<16x32xf32>
      %90 = arith.mulf %10, %89 : vector<16x32xf32>
      %91 = tpu.concatenate %42, %48, %54, %60, %66, %72, %78, %84, %90 in 1 : vector<16x32xf32>, vector<16x32xf32>, vector<16x32xf32>, vector<16x32xf32>, vector<16x32xf32>, vector<16x32xf32>, vector<16x32xf32>, vector<16x32xf32>, vector<16x32xf32> -> vector<16x288xf32>
      %92 = arith.truncf %91 : vector<16x288xf32> to vector<16x288xbf16>
      %c0_37 = arith.constant 0 : index
      %c0_38 = arith.constant 0 : index
      %93 = vector.load %arg8[%c0_37, %c0_38] : memref<16x288xbf16, #tpu.memory_space<vmem>>, vector<16x288xbf16>
      tpu.vector_store %arg8[%c0_37, %c0_38], %92 {strides = array<i32>} : memref<16x288xbf16, #tpu.memory_space<vmem>>, vector<16x288xbf16>,
    } else {
    }
    %c0 = arith.constant 0 : index
    %c0_1 = arith.constant 0 : index
    %3 = vector.load %arg8[%c0, %c0_1] : memref<16x288xbf16, #tpu.memory_space<vmem>>, vector<16x288xbf16>
    %c0_2 = arith.constant 0 : index
    %c0_3 = arith.constant 0 : index
    %4 = vector.load %arg5[%c0_2, %c0_3] : memref<288x128xbf16, #tpu.memory_space<vmem>>, vector<288x128xbf16>
    %cst = arith.constant dense<0.000000e+00> : vector<16x128xf32>
    %5 = tpu.matmul %3, %4, %cst {dimension_numbers = #tpu.dot_dimension_numbers<[1], [0], [0], [1], [0, 0, 1, 1], [], []>} : vector<16x288xbf16>, vector<288x128xbf16>, vector<16x128xf32> -> vector<16x128xf32>
    %c0_4 = arith.constant 0 : index
    %c0_5 = arith.constant 0 : index
    %6 = vector.load %arg6[%c0_4, %c0_5] : memref<1x128xf32, #tpu.memory_space<vmem>>, vector<1x128xf32>
    %7 = vector.broadcast %6 : vector<1x128xf32> to vector<16x128xf32>
    %8 = arith.addf %5, %7 : vector<16x128xf32>
    %c0_6 = arith.constant 0 : index
    %c0_7 = arith.constant 0 : index
    %9 = vector.load %arg7[%c0_6, %c0_7] : memref<16x128xf32, #tpu.memory_space<vmem>>, vector<16x128xf32>
    tpu.vector_store %arg7[%c0_6, %c0_7], %8 {strides = array<i32>} : memref<16x128xf32, #tpu.memory_space<vmem>>, vector<16x128xf32>,
    return
  }
  func.func @transform_0(%arg0: i32, %arg1: i32) -> (i32, i32) {
    %c0_i32 = arith.constant 0 : i32
    %c0_i32_0 = arith.constant 0 : i32
    return %arg0, %c0_i32 : i32, i32
  }
  func.func @transform_1(%arg0: i32, %arg1: i32) -> (i32, i32) {
    %c0_i32 = arith.constant 0 : i32
    %c0_i32_0 = arith.constant 0 : i32
    %c0_i32_1 = arith.constant 0 : i32
    return %c0_i32, %c0_i32_0 : i32, i32
  }
  func.func @transform_2(%arg0: i32, %arg1: i32) -> (i32, i32) {
    %c0_i32 = arith.constant 0 : i32
    %c0_i32_0 = arith.constant 0 : i32
    %c0_i32_1 = arith.constant 0 : i32
    return %c0_i32, %c0_i32_0 : i32, i32
  }
  func.func @transform_3(%arg0: i32, %arg1: i32) -> (i32, i32) {
    %c0_i32 = arith.constant 0 : i32
    %c0_i32_0 = arith.constant 0 : i32
    return %c0_i32, %arg1 : i32, i32
  }
  func.func @transform_4(%arg0: i32, %arg1: i32) -> (i32, i32) {
    %c0_i32 = arith.constant 0 : i32
    %c0_i32_0 = arith.constant 0 : i32
    return %c0_i32, %arg1 : i32, i32
  }
  func.func @transform_5(%arg0: i32, %arg1: i32) -> (i32, i32) {
    %c0_i32 = arith.constant 0 : i32
    return %arg0, %arg1 : i32, i32
  }
}

</mosaic_0001>

<llo_original>
// kernel: tpu_custom_call.1
$region0: #{tpu_custom_call.1}
  #allocation0 [shape = 'u32[]', space=smem, size = 0x4, offset = 0x4, fixed_abs, tag = 'smem constant byte address 0x4 - core index']
  #allocation1 [shape = 'u32[144,128]{1,0:T(1,128)}', space=vmem, size = 0x12000, scoped, tag = 'internal scratch']
  #allocation2 [shape = 'bf16[16,288]{1,0:T(8,128)(2,1)}', space=vmem, size = 0x3000, scoped, tag = 'scratch operand']
  %s0 = inlined_call_operand.hbm [shape: f32[16,32], index: 0, kind: input, shape index: {}]
  %s1 = inlined_call_operand.vmem [shape: f32[1,32], index: 1, kind: input, shape index: {}]
  %s2 = inlined_call_operand.vmem [shape: f32[1,32], index: 2, kind: input, shape index: {}]
  %s3 = inlined_call_operand.hbm [shape: bf16[288,128], index: 3, kind: input, shape index: {}]
  %s4 = inlined_call_operand.vmem [shape: f32[1,128], index: 4, kind: input, shape index: {}]
  %s5 = inlined_call_operand.hbm [shape: f32[16,128], index: 5, kind: output, shape index: {}]
  %s6 = sld [smem:[#allocation0]]
  $region42: #{tpu_custom_call.1} parent=0
    _
  %s8 = ssub.s32 1, %s6
  %s9 = scalar_select 0, %s8, %s6
  $region1: #{tpu_custom_call.1} parent=0
    #allocation3 [shape = 'u8[8192]{0}', space=vmem, size = 0x2000, scoped, tag = 'input window, operand 0, single buffered']
    #allocation4 [shape = 's32[1]{0}', space=sflag, size = 0x4, scoped, tag = 'scoped memory for tpu_custom_call.1']
    #allocation5 [shape = 's32[1]{0}', space=sflag, size = 0x4, scoped, tag = 'scoped memory for tpu_custom_call.1']
    #allocation6 [shape = 'u8[73728]{0}', space=vmem, size = 0x12000, scoped, tag = 'input window, operand 3, single buffered']
    #allocation7 [shape = 's32[1]{0}', space=sflag, size = 0x4, scoped, tag = 'scoped memory for tpu_custom_call.1']
    #allocation8 [shape = 'u8[8192]{0}', space=vmem, size = 0x2000, scoped, tag = 'output window, operand 0, single buffered']
    %10 = vsyncpa [#allocation4], 0
    %11 = vsyncpa [#allocation7], 0
    %12 = vsyncpa [#allocation5], 0
    // Predicated region
    $region2: #{tpu_custom_call.1} parent=1 // pred_check
      _
    $region3: #{tpu_custom_call.1} parent=1 // pred_check_branch
      %14 = sbr.rel (0) target = $region5
    $region4: #{tpu_custom_call.1} parent=1 // pred_region
      %s16 = ssub.s32 256, 256
      %17 = vsyncadd [#allocation4], %s16
      %s18 = sshll.u32 [#allocation3], 4
      %s19 = int_to_ptr.vmem [resolvable:$true] %s18
      %24 = dma.hbm_to_vmem [thread:$0]  %s0, 256, %s19, [#allocation4], 128, 128, 8
    $region5: #{tpu_custom_call.1} parent=1 // pred_fallthru
      _
    // Predicated region
    $region6: #{tpu_custom_call.1} parent=1 // pred_check
      _
    $region7: #{tpu_custom_call.1} parent=1 // pred_check_branch
      %26 = sbr.rel (0) target = $region9
    $region8: #{tpu_custom_call.1} parent=1 // pred_region
      _
    $region9: #{tpu_custom_call.1} parent=1 // pred_fallthru
      _
    // Predicated region
    $region10: #{tpu_custom_call.1} parent=1 // pred_check
      _
    $region11: #{tpu_custom_call.1} parent=1 // pred_check_branch
      %28 = sbr.rel (0) target = $region13
    $region12: #{tpu_custom_call.1} parent=1 // pred_region
      _
    $region13: #{tpu_custom_call.1} parent=1 // pred_fallthru
      _
    // Predicated region
    $region14: #{tpu_custom_call.1} parent=1 // pred_check
      _
    $region15: #{tpu_custom_call.1} parent=1 // pred_check_branch
      %30 = sbr.rel (0) target = $region17
    $region16: #{tpu_custom_call.1} parent=1 // pred_region
      %s32 = ssub.s32 2304, 2304
      %33 = vsyncadd [#allocation7], %s32
      %s34 = sshll.u32 [#allocation6], 4
      %s35 = int_to_ptr.vmem [resolvable:$true] %s34
      %40 = dma.hbm_to_vmem [thread:$0]  %s3, 2304, %s35, [#allocation7], 64, 64, 4
    $region17: #{tpu_custom_call.1} parent=1 // pred_fallthru
      _
    // Predicated region
    $region18: #{tpu_custom_call.1} parent=1 // pred_check
      _
    $region19: #{tpu_custom_call.1} parent=1 // pred_check_branch
      %42 = sbr.rel (0) target = $region21
    $region20: #{tpu_custom_call.1} parent=1 // pred_region
      _
    $region21: #{tpu_custom_call.1} parent=1 // pred_fallthru
      _
    // Predicated region
    $region22: #{tpu_custom_call.1} parent=1 // pred_check
      _
    $region23: #{tpu_custom_call.1} parent=1 // pred_check_branch
      %44 = sbr.rel (0) target = $region25
    $region24: #{tpu_custom_call.1} parent=1 // pred_region
      %45 = dma.done [#allocation4], 256
    $region25: #{tpu_custom_call.1} parent=1 // pred_fallthru
      _
    // Predicated region
    $region26: #{tpu_custom_call.1} parent=1 // pred_check
      _
    $region27: #{tpu_custom_call.1} parent=1 // pred_check_branch
      %47 = sbr.rel (0) target = $region29
    $region28: #{tpu_custom_call.1} parent=1 // pred_region
      %48 = dma.done [#allocation7], 2304
    $region29: #{tpu_custom_call.1} parent=1 // pred_fallthru
      _
    %p50 = scmp.eq.s32.totalorder 0, 0
    // Predicated region
    $region30: #{tpu_custom_call.1} parent=1 // pred_check
      %p51 = pneg %p50
    $region31: #{tpu_custom_call.1} parent=1 // pred_check_branch
      %53 = sbr.rel (%p51) target = $region33
    $region32: #{tpu_custom_call.1} parent=1 // pred_region
      %v54 = vld [vmem:[#allocation3] sm:$0xff]
      %v55 = vld [vmem:[#allocation3 + $0x8] sm:$0xff]
      %vm56 = vcmask 261120
      %v57 = vsel %vm56, %v54, 0.0
      %58 = vadd.xlane.f32.xlu0 %v57
      %v59 = vpop.xlane.xlu0 %58
      %v60 = vsel %vm56, %v55, 0.0
      %61 = vadd.xlane.f32.xlu0 %v60
      %v62 = vpop.xlane.xlu0 %61
      %v63 = vrcp.pop 32.0
      %v64 = vmul.f32 %v59, %v63
      %v65 = vmul.f32 %v62, %v63
      %v66 = vsub.f32 %v54, %v64
      %v67 = vsub.f32 %v55, %v65
      %v68 = vmul.f32 %v66, %v66
      %v69 = vmul.f32 %v67, %v67
      %v70 = vsel %vm56, %v68, 0.0
      %71 = vadd.xlane.f32.xlu0 %v70
      %v72 = vpop.xlane.xlu0 %71
      %v73 = vsel %vm56, %v69, 0.0
      %74 = vadd.xlane.f32.xlu0 %v73
      %v75 = vpop.xlane.xlu0 %74
      %v76 = vmul.f32 %v72, %v63
      %v77 = vmul.f32 %v75, %v63
      %v78 = vadd.f32 %v76, 1e-05
      %v79 = vadd.f32 %v77, 1e-05
      %v80 = vrsqrt.pop %v78
      %v81 = vrsqrt.pop %v79
      %v82 = vmul.f32 %v66, %v80
      %v83 = vmul.f32 %v67, %v81
      %v84 = vld [vmem:[%s1] sm:$0x1]
      %v86 = vlaneseq
      %v87 = vshrl.u32 %v86, 7
      %v88 = vsub.s32 0, %v87
      %v89 = vrot.slane %v84, %v88
      %v91 = vmul.f32 %v82, %v89
      %v92 = vmul.f32 %v83, %v89
      %v93 = vld [vmem:[%s2] sm:$0x1]
      %v95 = vlaneseq
      %v96 = vshrl.u32 %v95, 7
      %v97 = vsub.s32 0, %v96
      %v98 = vrot.slane %v93, %v97
      %v100 = vadd.f32 %v91, %v98
      %v101 = vadd.f32 %v92, %v98
      %v102 = vmul.f32 %v100, 1.75
      %v103 = vmul.f32 %v101, 1.75
      %v104 = vsub.f32 %v102, -3.5
      %v105 = vsub.f32 %v103, -3.5
      %v106 = vmul.f32 %v104, %v104
      %v107 = vmul.f32 %v105, %v105
      %v108 = vsub.f32 0.0, %v106
      %v109 = vsub.f32 0.0, %v107
      %v110 = vmul.f32 %v108, 1.442695
      %v111 = vpow.pop %v110
      %v112 = vmul.f32 %v109, 1.442695
      %v113 = vpow.pop %v112
      %v114 = vsub.f32 %v102, -2.5
      %v115 = vsub.f32 %v103, -2.5
      %v116 = vmul.f32 %v114, %v114
      %v117 = vmul.f32 %v115, %v115
      %v118 = vsub.f32 0.0, %v116
      %v119 = vsub.f32 0.0, %v117
      %v120 = vmul.f32 %v118, 1.442695
      %v121 = vpow.pop %v120
      %v122 = vmul.f32 %v119, 1.442695
      %v123 = vpow.pop %v122
      %v124 = vsub.f32 %v102, -1.5
      %v125 = vsub.f32 %v103, -1.5
      %v126 = vmul.f32 %v124, %v124
      %v127 = vmul.f32 %v125, %v125
      %v128 = vsub.f32 0.0, %v126
      %v129 = vsub.f32 0.0, %v127
      %v130 = vmul.f32 %v128, 1.442695
      %v131 = vpow.pop %v130
      %v132 = vmul.f32 %v129, 1.442695
      %v133 = vpow.pop %v132
      %v134 = vsub.f32 %v102, -0.5
      %v135 = vsub.f32 %v103, -0.5
      %v136 = vmul.f32 %v134, %v134
      %v137 = vmul.f32 %v135, %v135
      %v138 = vsub.f32 0.0, %v136
      %v139 = vsub.f32 0.0, %v137
      %v140 = vmul.f32 %v138, 1.442695
      %v141 = vpow.pop %v140
      %v142 = vmul.f32 %v139, 1.442695
      %v143 = vpow.pop %v142
      %v144 = vsub.f32 %v102, 0.5
      %v145 = vsub.f32 %v103, 0.5
      %v146 = vmul.f32 %v144, %v144
      %v147 = vmul.f32 %v145, %v145
      %v148 = vsub.f32 0.0, %v146
      %v149 = vsub.f32 0.0, %v147
      %v150 = vmul.f32 %v148, 1.442695
      %v151 = vpow.pop %v150
      %v152 = vmul.f32 %v149, 1.442695
      %v153 = vpow.pop %v152
      %v154 = vsub.f32 %v102, 1.5
      %v155 = vsub.f32 %v103, 1.5
      %v156 = vmul.f32 %v154, %v154
      %v157 = vmul.f32 %v155, %v155
      %v158 = vsub.f32 0.0, %v156
      %v159 = vsub.f32 0.0, %v157
      %v160 = vmul.f32 %v158, 1.442695
      %v161 = vpow.pop %v160
      %v162 = vmul.f32 %v159, 1.442695
      %v163 = vpow.pop %v162
      %v164 = vsub.f32 %v102, 2.5
      %v165 = vsub.f32 %v103, 2.5
      %v166 = vmul.f32 %v164, %v164
      %v167 = vmul.f32 %v165, %v165
      %v168 = vsub.f32 0.0, %v166
      %v169 = vsub.f32 0.0, %v167
      %v170 = vmul.f32 %v168, 1.442695
      %v171 = vpow.pop %v170
      %v172 = vmul.f32 %v169, 1.442695
      %v173 = vpow.pop %v172
      %v174 = vsub.f32 %v102, 3.5
      %v175 = vsub.f32 %v103, 3.5
      %v176 = vmul.f32 %v174, %v174
      %v177 = vmul.f32 %v175, %v175
      %v178 = vsub.f32 0.0, %v176
      %v179 = vsub.f32 0.0, %v177
      %v180 = vmul.f32 %v178, 1.442695
      %v181 = vpow.pop %v180
      %v182 = vmul.f32 %v179, 1.442695
      %v183 = vpow.pop %v182
      %v184 = vxor.u32 %v54, 2147483648
      %v185 = vxor.u32 %v55, 2147483648
      %v186 = vmul.f32 %v184, 1.442695
      %v187 = vpow.pop %v186
      %v188 = vmul.f32 %v185, 1.442695
      %v189 = vpow.pop %v188
      %v190 = vadd.f32 %v187, 1.0
      %v191 = vadd.f32 %v189, 1.0
      %v192 = vrcp.pop %v190
      %v193 = vmul.f32 1.0, %v192
      %v194 = vrcp.pop %v191
      %v195 = vmul.f32 1.0, %v194
      %v196 = vmul.f32 %v54, %v193
      %v197 = vmul.f32 %v55, %v195
      %200 = vrot.lane.b32.xlu0 %v121, 32
      %v201 = vpop.permute.xlu0 %200
      %202 = vrot.lane.b32.xlu0 %v123, 32
      %v203 = vpop.permute.xlu0 %202
      %208 = vrot.lane.b32.xlu0 %v131, 64
      %v209 = vpop.permute.xlu0 %208
      %210 = vrot.lane.b32.xlu0 %v133, 64
      %v211 = vpop.permute.xlu0 %210
      %216 = vrot.lane.b32.xlu0 %v141, 96
      %v217 = vpop.permute.xlu0 %216
      %218 = vrot.lane.b32.xlu0 %v143, 96
      %v219 = vpop.permute.xlu0 %218
      %224 = vrot.lane.b32.xlu0 %v161, 32
      %v225 = vpop.permute.xlu0 %224
      %226 = vrot.lane.b32.xlu0 %v163, 32
      %v227 = vpop.permute.xlu0 %226
      %232 = vrot.lane.b32.xlu0 %v171, 64
      %v233 = vpop.permute.xlu0 %232
      %234 = vrot.lane.b32.xlu0 %v173, 64
      %v235 = vpop.permute.xlu0 %234
      %240 = vrot.lane.b32.xlu0 %v181, 96
      %v241 = vpop.permute.xlu0 %240
      %242 = vrot.lane.b32.xlu0 %v183, 96
      %v243 = vpop.permute.xlu0 %242
      %v246 = vsel %vm56, %v111, %v201
      %v247 = vsel %vm56, %v113, %v203
      %vm248 = vcmask 523264
      %v249 = vsel %vm248, %v246, %v209
      %v250 = vsel %vm248, %v247, %v211
      %vm251 = vcmask 785408
      %v252 = vsel %vm251, %v249, %v217
      %v253 = vsel %vm251, %v250, %v219
      %v254 = vsel %vm56, %v151, %v225
      %v255 = vsel %vm56, %v153, %v227
      %v256 = vsel %vm248, %v254, %v233
      %v257 = vsel %vm248, %v255, %v235
      %v258 = vsel %vm251, %v256, %v241
      %v259 = vsel %vm251, %v257, %v243
      %v260 = vpack.c.bf16 %v253, %v252
      %v261 = vpack.c.bf16 %v259, %v258
      %v262 = vpack.c.bf16 %v197, %v196
      %v266 = vunpack.c.l.b16 %v260
      %v267 = vunpack.c.l.b16 %v261
      %v268 = vunpack.c.l.b16 %v262
      %v269 = vunpack.c.h.b16 %v260
      %v270 = vunpack.c.h.b16 %v261
      %v271 = vunpack.c.h.b16 %v262
      %v272 = vpack.c.b16 %v267, %v266
      %v273 = vpack.c.b16 %v268, %v268
      %v274 = vpack.c.b16 %v270, %v269
      %v275 = vpack.c.b16 %v271, %v271
      %280 = vst [vmem:[#allocation2] sm:$0xff] %v272
      %vm281 = vcmask 257024
      %282 = vst.msk [vmem:[#allocation2 + $0x8] sm:$0xf] %vm281, %v273
      %283 = vst [vmem:[#allocation2 + $0xc] sm:$0xff] %v274
      %284 = vst.msk [vmem:[#allocation2 + $0x14] sm:$0xf] %vm281, %v275
    $region33: #{tpu_custom_call.1} parent=1 // pred_fallthru
      _
    %v285 = vld [vmem:[#allocation2] sm:$0xff]
    %v286 = vld [vmem:[#allocation2 + $0x8] sm:$0xf]
    %v287 = vld [vmem:[#allocation2 + $0xc] sm:$0xff]
    %v288 = vld [vmem:[#allocation2 + $0x14] sm:$0xf]
    %v289 = vld [vmem:[#allocation6] sm:$0xf]
    %v290 = vld [vmem:[#allocation6 + $0x4] sm:$0xf]
    %v291 = vld [vmem:[#allocation6 + $0x8] sm:$0xf]
    %v292 = vld [vmem:[#allocation6 + $0xc] sm:$0xf]
    %v293 = vld [vmem:[#allocation6 + $0x10] sm:$0xf]
    %v294 = vld [vmem:[#allocation6 + $0x14] sm:$0xf]
    %v295 = vld [vmem:[#allocation6 + $0x18] sm:$0xf]
    %v296 = vld [vmem:[#allocation6 + $0x1c] sm:$0xf]
    %v297 = vld [vmem:[#allocation6 + $0x20] sm:$0xf]
    %v298 = vld [vmem:[#allocation6 + $0x24] sm:$0xf]
    %v299 = vld [vmem:[#allocation6 + $0x28] sm:$0xf]
    %v300 = vld [vmem:[#allocation6 + $0x2c] sm:$0xf]
    %v301 = vld [vmem:[#allocation6 + $0x30] sm:$0xf]
    %v302 = vld [vmem:[#allocation6 + $0x34] sm:$0xf]
    %v303 = vld [vmem:[#allocation6 + $0x38] sm:$0xf]
    %v304 = vld [vmem:[#allocation6 + $0x3c] sm:$0xf]
    %v305 = vld [vmem:[#allocation6 + $0x40] sm:$0xf]
    %v306 = vld [vmem:[#allocation6 + $0x44] sm:$0xf]
    %v307 = vld [vmem:[#allocation6 + $0x48] sm:$0xf]
    %v308 = vld [vmem:[#allocation6 + $0x4c] sm:$0xf]
    %v309 = vld [vmem:[#allocation6 + $0x50] sm:$0xf]
    %v310 = vld [vmem:[#allocation6 + $0x54] sm:$0xf]
    %v311 = vld [vmem:[#allocation6 + $0x58] sm:$0xf]
    %v312 = vld [vmem:[#allocation6 + $0x5c] sm:$0xf]
    %v313 = vld [vmem:[#allocation6 + $0x60] sm:$0xf]
    %v314 = vld [vmem:[#allocation6 + $0x64] sm:$0xf]
    %v315 = vld [vmem:[#allocation6 + $0x68] sm:$0xf]
    %v316 = vld [vmem:[#allocation6 + $0x6c] sm:$0xf]
    %v317 = vld [vmem:[#allocation6 + $0x70] sm:$0xf]
    %v318 = vld [vmem:[#allocation6 + $0x74] sm:$0xf]
    %v319 = vld [vmem:[#allocation6 + $0x78] sm:$0xf]
    %v320 = vld [vmem:[#allocation6 + $0x7c] sm:$0xf]
    %v321 = vld [vmem:[#allocation6 + $0x80] sm:$0xf]
    %v322 = vld [vmem:[#allocation6 + $0x84] sm:$0xf]
    %v323 = vld [vmem:[#allocation6 + $0x88] sm:$0xf]
    %v324 = vld [vmem:[#allocation6 + $0x8c] sm:$0xf]
    %v325 = vld [vmem:[%s4] sm:$0x1]
    %v327 = vlaneseq
    %v328 = vshrl.u32 %v327, 7
    %v329 = vsub.s32 0, %v328
    %v330 = vrot.slane %v325, %v329
    %v336 = vunpack.c.l.b16 %v285
    %v337 = vunpack.c.h.b16 %v285
    %v338 = vunpack.c.l.b16 %v286
    %v339 = vunpack.c.l.b16 %v287
    %v340 = vunpack.c.h.b16 %v287
    %v341 = vunpack.c.l.b16 %v288
    %v342 = vpack.c.b16 %v339, %v336
    %v343 = vpack.c.b16 %v340, %v337
    %v344 = vpack.c.b16 %v341, %v338
    %v383 = vunpack.c.l.b16 %v289
    %v384 = vunpack.c.l.b16 %v290
    %v385 = vunpack.c.l.b16 %v291
    %v386 = vunpack.c.l.b16 %v292
    %v387 = vunpack.c.l.b16 %v293
    %v388 = vunpack.c.l.b16 %v294
    %v389 = vunpack.c.l.b16 %v295
    %v390 = vunpack.c.l.b16 %v296
    %v391 = vunpack.c.l.b16 %v297
    %v392 = vunpack.c.l.b16 %v298
    %v393 = vunpack.c.l.b16 %v299
    %v394 = vunpack.c.l.b16 %v300
    %v395 = vunpack.c.l.b16 %v301
    %v396 = vunpack.c.l.b16 %v302
    %v397 = vunpack.c.l.b16 %v303
    %v398 = vunpack.c.l.b16 %v304
    %v399 = vunpack.c.l.b16 %v305
    %v400 = vunpack.c.l.b16 %v306
    %v401 = vunpack.c.l.b16 %v307
    %v402 = vunpack.c.l.b16 %v308
    %v403 = vunpack.c.l.b16 %v309
    %v404 = vunpack.c.l.b16 %v310
    %v405 = vunpack.c.l.b16 %v311
    %v406 = vunpack.c.l.b16 %v312
    %v407 = vunpack.c.l.b16 %v313
    %v408 = vunpack.c.l.b16 %v314
    %v409 = vunpack.c.l.b16 %v315
    %v410 = vunpack.c.l.b16 %v316
    %v411 = vunpack.c.l.b16 %v317
    %v412 = vunpack.c.l.b16 %v318
    %v413 = vunpack.c.l.b16 %v319
    %v414 = vunpack.c.l.b16 %v320
    %v415 = vunpack.c.l.b16 %v321
    %v416 = vunpack.c.l.b16 %v322
    %v417 = vunpack.c.l.b16 %v323
    %v418 = vunpack.c.l.b16 %v324
    %v419 = vpack.c.b16 %v384, %v383
    %v420 = vpack.c.b16 %v386, %v385
    %v421 = vpack.c.b16 %v388, %v387
    %v422 = vpack.c.b16 %v390, %v389
    %v423 = vpack.c.b16 %v392, %v391
    %v424 = vpack.c.b16 %v394, %v393
    %v425 = vpack.c.b16 %v396, %v395
    %v426 = vpack.c.b16 %v398, %v397
    %v427 = vpack.c.b16 %v400, %v399
    %v428 = vpack.c.b16 %v402, %v401
    %v429 = vpack.c.b16 %v404, %v403
    %v430 = vpack.c.b16 %v406, %v405
    %v431 = vpack.c.b16 %v408, %v407
    %v432 = vpack.c.b16 %v410, %v409
    %v433 = vpack.c.b16 %v412, %v411
    %v434 = vpack.c.b16 %v414, %v413
    %v435 = vpack.c.b16 %v416, %v415
    %v436 = vpack.c.b16 %v418, %v417
    %vm455 = vcmask 261120
    %v457 = vsel %vm455, %v344, 0
    %459 = vmatprep.subr.bf16.mxu0 0
    %460 = vmatpush1.bf16.msra.mxu0 %v426
    %461 = vmatprep.subr.bf16.mxu0 0
    %462 = vmatpush1.bf16.msra.mxu0 %v425
    %463 = vmatprep.subr.bf16.mxu0 0
    %464 = vmatpush1.bf16.msra.mxu0 %v424
    %465 = vmatprep.subr.bf16.mxu0 0
    %466 = vmatpush1.bf16.msra.mxu0 %v423
    %467 = vmatprep.subr.bf16.mxu0 0
    %468 = vmatpush1.bf16.msra.mxu0 %v422
    %469 = vmatprep.subr.bf16.mxu0 0
    %470 = vmatpush1.bf16.msra.mxu0 %v421
    %471 = vmatprep.subr.bf16.mxu0 0
    %472 = vmatpush1.bf16.msra.mxu0 %v420
    %473 = vmatprep.subr.bf16.mxu0 0
    %474 = vmatpush1.bf16.msra.mxu0 %v419
    %475 = vmatprep.subr.bf16.mxu0 0
    %476 = vmatpush2.bf16.msra.mxu0 %v434
    %477 = vmatprep.subr.bf16.mxu0 0
    %478 = vmatpush2.bf16.msra.mxu0 %v433
    %479 = vmatprep.subr.bf16.mxu0 0
    %480 = vmatpush2.bf16.msra.mxu0 %v432
    %481 = vmatprep.subr.bf16.mxu0 0
    %482 = vmatpush2.bf16.msra.mxu0 %v431
    %483 = vmatprep.subr.bf16.mxu0 0
    %484 = vmatpush2.bf16.msra.mxu0 %v430
    %485 = vmatprep.subr.bf16.mxu0 0
    %486 = vmatpush2.bf16.msra.mxu0 %v429
    %487 = vmatprep.subr.bf16.mxu0 0
    %488 = vmatpush2.bf16.msra.mxu0 %v428
    %489 = vmatprep.subr.bf16.mxu0 0
    %490 = vmatpush2.bf16.msra.mxu0 %v427
    %491 = vmatprep.mubr.bf16.mxu0 %v343
    %492 = vmatmul.mubr.bf16.gmra.mxu0 %v342
    %v493 = vpop.f32.mrf.mxu0
    %v494 = vadd.f32 %v330, %v493
    %v495 = vpop.f32.mrf.mxu0
    %v496 = vpop.f32.mrf.mxu0
    %v497 = vadd.f32 %v330, %v496
    %v498 = vpop.f32.mrf.mxu0
    %499 = vdwg.mxu0
    %500 = vmatprep.subr.bf16.mxu0 0
    %501 = vmatpush1.bf16.msra.mxu0 0
    %502 = vmatprep.subr.bf16.mxu0 0
    %503 = vmatpush1.bf16.msra.mxu0 0
    %504 = vmatprep.subr.bf16.mxu0 0
    %505 = vmatpush1.bf16.msra.mxu0 0
    %506 = vmatprep.subr.bf16.mxu0 0
    %507 = vmatpush1.bf16.msra.mxu0 0
    %508 = vmatprep.subr.bf16.mxu0 0
    %509 = vmatpush1.bf16.msra.mxu0 0
    %510 = vmatprep.subr.bf16.mxu0 0
    %511 = vmatpush1.bf16.msra.mxu0 0
    %512 = vmatprep.subr.bf16.mxu0 0
    %513 = vmatpush1.bf16.msra.mxu0 %v436
    %514 = vmatprep.subr.bf16.mxu0 0
    %515 = vmatpush1.bf16.msra.mxu0 %v435
    %516 = vmatprep.subr.bf16.mxu0 0
    %517 = vmatpush2.bf16.msra.mxu0 0
    %518 = vmatprep.subr.bf16.mxu0 0
    %519 = vmatpush2.bf16.msra.mxu0 0
    %520 = vmatprep.subr.bf16.mxu0 0
    %521 = vmatpush2.bf16.msra.mxu0 0
    %522 = vmatprep.subr.bf16.mxu0 0
    %523 = vmatpush2.bf16.msra.mxu0 0
    %524 = vmatprep.subr.bf16.mxu0 0
    %525 = vmatpush2.bf16.msra.mxu0 0
    %526 = vmatprep.subr.bf16.mxu0 0
    %527 = vmatpush2.bf16.msra.mxu0 0
    %528 = vmatprep.subr.bf16.mxu0 0
    %529 = vmatpush2.bf16.msra.mxu0 0
    %530 = vmatprep.subr.bf16.mxu0 0
    %531 = vmatpush2.bf16.msra.mxu0 0
    %532 = vmatprep.mubr.bf16.mxu0 0
    %533 = vmatmul.mubr.bf16.gmra.mxu0 %v457
    %v534 = vpop.f32.mrf.mxu0
    %v535 = vadd.f32 %v494, %v534
    %v536 = vpop.f32.mrf.mxu0
    %v537 = vpop.f32.mrf.mxu0
    %v538 = vadd.f32 %v497, %v537
    %v539 = vpop.f32.mrf.mxu0
    %540 = vdwg.mxu0
    %541 = vst [vmem:[#allocation8] sm:$0xff] %v535
    %542 = vst [vmem:[#allocation8 + $0x8] sm:$0xff] %v538
    // Predicated region
    $region34: #{tpu_custom_call.1} parent=1 // pred_check
      _
    $region35: #{tpu_custom_call.1} parent=1 // pred_check_branch
      %544 = sbr.rel (0) target = $region37
    $region36: #{tpu_custom_call.1} parent=1 // pred_region
      %s546 = ssub.s32 256, 256
      %547 = vsyncadd [#allocation5], %s546
      %s548 = sshll.u32 [#allocation8], 4
      %s549 = int_to_ptr.vmem [resolvable:$true] %s548
      %554 = dma.vmem_to_hbm [thread:$0]  %s549, 256, %s5, [#allocation5], 128, 128, 8
    $region37: #{tpu_custom_call.1} parent=1 // pred_fallthru
      _
    // Predicated region
    $region38: #{tpu_custom_call.1} parent=1 // pred_check
      _
    $region39: #{tpu_custom_call.1} parent=1 // pred_check_branch
      %556 = sbr.rel (0) target = $region41
    $region40: #{tpu_custom_call.1} parent=1 // pred_region
      %557 = dma.done [#allocation5], 256
    $region41: #{tpu_custom_call.1} parent=1 // pred_fallthru
      _
    %558 = vsyncpa [#allocation4], 1
    %559 = vsyncpa [#allocation7], 1
    %560 = vsyncpa [#allocation5], 1

</llo_original>
